<compile_context>
chip_gen: v6e
topology: v6e:2x2x1
jax: 0.10.0
libtpu: 0.0.40
codegen_flags: <defaults>
</compile_context>

<pallas_src>
import functools

import jax
import jax.numpy as jnp
from jax import lax
from jax.experimental import pallas as pl
from jax.experimental.pallas import tpu as pltpu

LANE = 128
MAX_BLOCK_ROWS = 4096          # 2 MiB per f32 input block per grid step
NEG_PAD = -1.0e4               # sigmoid(NEG_PAD) == 0.0 exactly in f32


def _sublane_multiple(dtype):
    # 32-bit -> 8 rows/vreg, 16-bit -> 16, 8-bit -> 32 (sublane packing).
    return max(8, 32 // jnp.dtype(dtype).itemsize)


def _dice_bce_kernel(x_ref, t_ref, o_ref,
                     acc_inter, acc_pt, acc_bce,
                     *, block_rows, tail_rows, inv_n, smooth):
    i = pl.program_id(0)

    @pl.when(i == 0)
    def _init():
        acc_inter[...] = jnp.zeros_like(acc_inter)
        acc_pt[...] = jnp.zeros_like(acc_pt)
        acc_bce[...] = jnp.zeros_like(acc_bce)

    # Native-dtype block load, widen to f32 in registers only.
    x = x_ref[...].astype(jnp.float32)
    t = t_ref[...].astype(jnp.float32)

    # Mask the ragged tail of the last block (branch emitted only if needed).
    if tail_rows < block_rows:
        limit = jnp.where(i == pl.num_programs(0) - 1, tail_rows, block_rows)
        row_idx = lax.broadcasted_iota(jnp.int32, (block_rows, LANE), 0)
        keep = row_idx < limit
        x = jnp.where(keep, x, NEG_PAD)
        t = jnp.where(keep, t, 0.0)

    # Stable sigmoid + BCE-with-logits (2 transcendentals: exp, log1p).
    #   sigmoid(x) = where(x>=0, 1, e) / (1+e),   e = exp(-|x|)
    #   bce_el     = min(max(x,0) - x*t + log1p(e), 100)
    # min(.,100) reproduces torch.binary_cross_entropy's -100 log clamp for
    # binary targets.  Padded / masked elements (x=-1e4, t=0) contribute 0.
    e = jnp.exp(-jnp.abs(x))
    sp = jnp.log1p(e)
    p = jnp.where(x >= 0.0, 1.0, e) * pl.reciprocal(1.0 + e, approx=False)
    bce_el = jnp.minimum(jnp.maximum(x, 0.0) - x * t + sp, 100.0)

    # Vreg-sized accumulators: reduce the leading (vreg-count) axis with plain
    # VALU adds; cross-lane/sublane reductions happen once, in finalize.
    r = block_rows // 8
    acc_inter[...] += (p * t).reshape(r, 8, LANE).sum(axis=0)
    acc_pt[...] += (p + t).reshape(r, 8, LANE).sum(axis=0)
    acc_bce[...] += bce_el.reshape(r, 8, LANE).sum(axis=0)

    @pl.when(i == pl.num_programs(0) - 1)
    def _finalize():
        inter = jnp.sum(acc_inter[...], keepdims=True)     # (1, 1)
        spt = jnp.sum(acc_pt[...], keepdims=True)
        sb = jnp.sum(acc_bce[...], keepdims=True)
        dice = 1.0 - (2.0 * inter + smooth) / (spt + smooth)
        o_ref[...] = sb * inv_n + dice


def dice_bce_loss(logits, targets, smooth=1.0):
    """Pallas implementation of DiceBCELoss.forward(inputs, targets, smooth)."""
    assert logits.shape == targets.shape
    n_valid = 1
    for d in logits.shape:
        n_valid *= int(d)

    x = logits.reshape(-1)                 # free: contiguous reshape, no cast
    t = targets.reshape(-1)
    if t.dtype == jnp.bool_:
        t = t.astype(jnp.int8)             # keep mask at 1 B/element

    row_align = max(_sublane_multiple(x.dtype), _sublane_multiple(t.dtype))
    rows_total = pl.cdiv(n_valid, LANE)
    rows = pl.cdiv(rows_total, row_align) * row_align

    pad = rows * LANE - n_valid
    if pad:
        # Pad only to (row_align, 128) granularity; padded elements contribute
        # exactly 0 to every sum (sigmoid(-1e4)=0, t=0, bce term=0).
        x = jnp.pad(x, (0, pad), constant_values=jnp.asarray(NEG_PAD, x.dtype))
        t = jnp.pad(t, (0, pad), constant_values=jnp.asarray(0, t.dtype))
    x2 = x.reshape(rows, LANE)
    t2 = t.reshape(rows, LANE)

    block_rows = min(MAX_BLOCK_ROWS, rows)          # both multiples of row_align
    num_blocks = pl.cdiv(rows, block_rows)
    tail_rows = rows - (num_blocks - 1) * block_rows   # rows valid in last block

    kernel = functools.partial(
        _dice_bce_kernel,
        block_rows=block_rows, tail_rows=tail_rows,
        inv_n=1.0 / float(n_valid), smooth=float(smooth))

    out = pl.pallas_call(
        kernel,
        out_shape=jax.ShapeDtypeStruct((1, 1), jnp.float32),
        grid_spec=pltpu.PrefetchScalarGridSpec(
            num_scalar_prefetch=0,
            grid=(num_blocks,),
            in_specs=[
                pl.BlockSpec((block_rows, LANE), lambda i: (i, 0)),
                pl.BlockSpec((block_rows, LANE), lambda i: (i, 0)),
            ],
            out_specs=pl.BlockSpec((1, 1), lambda i: (0, 0)),
            scratch_shapes=[
                pltpu.VMEM((8, LANE), jnp.float32),   # sum(p*t) partials
                pltpu.VMEM((8, LANE), jnp.float32),   # sum(p)+sum(t) partials
                pltpu.VMEM((8, LANE), jnp.float32),   # sum(bce) partials
            ],
        ),
        compiler_params=pltpu.CompilerParams(
            dimension_semantics=("arbitrary",),   # sequential accumulation axis
            vmem_limit_bytes=48 * 1024 * 1024,
        ),
    )(x2, t2)
    return out[0, 0]


def _reference_dice_bce(logits, targets, smooth=1.0):
    p = jax.nn.sigmoid(logits.astype(jnp.float32)).reshape(-1)
    t = targets.reshape(-1).astype(jnp.float32)
    inter = jnp.sum(p * t)
    dice = 1.0 - (2.0 * inter + smooth) / (jnp.sum(p) + jnp.sum(t) + smooth)
    bce = jnp.mean(-(t * jnp.log(p) + (1.0 - t) * jnp.log(1.0 - p)))
    return bce + dice


if __name__ == "__main__":
    key = jax.random.PRNGKey(0)
    k1, k2 = jax.random.split(key)

    # Small shapes consistent with a UNet segmentation head: NCHW logits + binary mask.
    shape = (2, 4, 16, 16)
    logits = jax.random.normal(k1, shape, dtype=jnp.float32)
    targets = (jax.random.uniform(k2, shape) > 0.5).astype(jnp.float32)

    loss = dice_bce_loss(logits, targets, smooth=1.0)
    loss = jax.block_until_ready(loss)

    ref = _reference_dice_bce(logits, targets, smooth=1.0)
    assert jnp.allclose(loss, ref, rtol=1e-5, atol=1e-5), (loss, ref)

    print("KERNEL_OK")
</pallas_src>

<mosaic_0001>
module attributes {stable_mosaic.version = 11 : i64} {
  func.func @_dice_bce_kernel(%arg0: i32, %arg1: memref<16x128xf32, #tpu.memory_space<vmem>>, %arg2: memref<16x128xf32, #tpu.memory_space<vmem>>, %arg3: memref<1x1xf32, #tpu.memory_space<vmem>>, %arg4: memref<8x128xf32, #tpu.memory_space<vmem>>, %arg5: memref<8x128xf32, #tpu.memory_space<vmem>>, %arg6: memref<8x128xf32, #tpu.memory_space<vmem>>) attributes {dimension_semantics = [#tpu.dimension_semantics<arbitrary>], iteration_bounds = array<i64: 1>, scalar_prefetch = 0 : i64, scratch_operands = 3 : i64, tpu.core_type = #tpu.core_type<tc>, window_params = [{transform_indices = @transform_0, window_bounds = array<i64: 16, 128>}, {transform_indices = @transform_1, window_bounds = array<i64: 16, 128>}, {pipeline_mode = #tpu.pipeline_mode<synchronous>, transform_indices = @transform_2, window_bounds = array<i64: 1, 1>}]} {
    %c0_i32 = arith.constant 0 : i32
    %0 = arith.cmpi eq, %arg0, %c0_i32 : i32
    %1 = arith.extui %0 : i1 to i32
    %c0_i32_0 = arith.constant 0 : i32
    %2 = arith.cmpi ne, %1, %c0_i32_0 : i32
    scf.if %2 {
      %cst_26 = arith.constant 0.000000e+00 : f32
      %45 = vector.broadcast %cst_26 : f32 to vector<8x128xf32>
      %c0_27 = arith.constant 0 : index
      %c0_28 = arith.constant 0 : index
      %46 = vector.load %arg4[%c0_27, %c0_28] : memref<8x128xf32, #tpu.memory_space<vmem>>, vector<8x128xf32>
      tpu.vector_store %arg4[%c0_27, %c0_28], %45 {strides = array<i32>} : memref<8x128xf32, #tpu.memory_space<vmem>>, vector<8x128xf32>,
      %cst_29 = arith.constant 0.000000e+00 : f32
      %47 = vector.broadcast %cst_29 : f32 to vector<8x128xf32>
      %c0_30 = arith.constant 0 : index
      %c0_31 = arith.constant 0 : index
      %48 = vector.load %arg5[%c0_30, %c0_31] : memref<8x128xf32, #tpu.memory_space<vmem>>, vector<8x128xf32>
      tpu.vector_store %arg5[%c0_30, %c0_31], %47 {strides = array<i32>} : memref<8x128xf32, #tpu.memory_space<vmem>>, vector<8x128xf32>,
      %cst_32 = arith.constant 0.000000e+00 : f32
      %49 = vector.broadcast %cst_32 : f32 to vector<8x128xf32>
      %c0_33 = arith.constant 0 : index
      %c0_34 = arith.constant 0 : index
      %50 = vector.load %arg6[%c0_33, %c0_34] : memref<8x128xf32, #tpu.memory_space<vmem>>, vector<8x128xf32>
      tpu.vector_store %arg6[%c0_33, %c0_34], %49 {strides = array<i32>} : memref<8x128xf32, #tpu.memory_space<vmem>>, vector<8x128xf32>,
    } else {
    }
    %c0 = arith.constant 0 : index
    %c0_1 = arith.constant 0 : index
    %3 = vector.load %arg1[%c0, %c0_1] : memref<16x128xf32, #tpu.memory_space<vmem>>, vector<16x128xf32>
    %c0_2 = arith.constant 0 : index
    %c0_3 = arith.constant 0 : index
    %4 = vector.load %arg2[%c0_2, %c0_3] : memref<16x128xf32, #tpu.memory_space<vmem>>, vector<16x128xf32>
    %5 = math.absf %3 : vector<16x128xf32>
    %cst = arith.constant 0.000000e+00 : f32
    %6 = vector.broadcast %cst : f32 to vector<16x128xf32>
    %7 = arith.subf %6, %5 : vector<16x128xf32>
    %8 = math.exp %7 : vector<16x128xf32>
    %9 = math.log1p %8 : vector<16x128xf32>
    %cst_4 = arith.constant 0.000000e+00 : f32
    %10 = vector.broadcast %cst_4 : f32 to vector<16x128xf32>
    %11 = arith.cmpf oge, %3, %10 : vector<16x128xf32>
    %cst_5 = arith.constant 1.000000e+00 : f32
    %12 = vector.broadcast %cst_5 : f32 to vector<16x128xf32>
    %13 = arith.select %11, %12, %8 : vector<16x128xi1>, vector<16x128xf32>
    %cst_6 = arith.constant 1.000000e+00 : f32
    %14 = vector.broadcast %cst_6 : f32 to vector<16x128xf32>
    %15 = arith.addf %14, %8 : vector<16x128xf32>
    %16 = tpu.reciprocal %15 : vector<16x128xf32> -> vector<16x128xf32>
    %17 = arith.mulf %13, %16 : vector<16x128xf32>
    %cst_7 = arith.constant 0.000000e+00 : f32
    %18 = vector.broadcast %cst_7 : f32 to vector<16x128xf32>
    %19 = arith.maximumf %3, %18 : vector<16x128xf32>
    %20 = arith.mulf %3, %4 : vector<16x128xf32>
    %21 = arith.subf %19, %20 : vector<16x128xf32>
    %22 = arith.addf %21, %9 : vector<16x128xf32>
    %cst_8 = arith.constant 1.000000e+02 : f32
    %23 = vector.broadcast %cst_8 : f32 to vector<16x128xf32>
    %24 = arith.minimumf %22, %23 : vector<16x128xf32>
    %c0_9 = arith.constant 0 : index
    %c0_10 = arith.constant 0 : index
    %25 = vector.load %arg4[%c0_9, %c0_10] : memref<8x128xf32, #tpu.memory_space<vmem>>, vector<8x128xf32>
    %26 = arith.mulf %17, %4 : vector<16x128xf32>
    %27 = vector.shape_cast %26 : vector<16x128xf32> to vector<2x8x128xf32>
    %cst_11 = arith.constant dense<0.000000e+00> : vector<8x128xf32>
    %28 = vector.multi_reduction <add>, %27, %cst_11 [0] : vector<2x8x128xf32> to vector<8x128xf32>
    %29 = arith.addf %25, %28 : vector<8x128xf32>
    %c0_12 = arith.constant 0 : index
    %c0_13 = arith.constant 0 : index
    %30 = vector.load %arg4[%c0_12, %c0_13] : memref<8x128xf32, #tpu.memory_space<vmem>>, vector<8x128xf32>
    tpu.vector_store %arg4[%c0_12, %c0_13], %29 {strides = array<i32>} : memref<8x128xf32, #tpu.memory_space<vmem>>, vector<8x128xf32>,
    %c0_14 = arith.constant 0 : index
    %c0_15 = arith.constant 0 : index
    %31 = vector.load %arg5[%c0_14, %c0_15] : memref<8x128xf32, #tpu.memory_space<vmem>>, vector<8x128xf32>
    %32 = arith.addf %17, %4 : vector<16x128xf32>
    %33 = vector.shape_cast %32 : vector<16x128xf32> to vector<2x8x128xf32>
    %cst_16 = arith.constant dense<0.000000e+00> : vector<8x128xf32>
    %34 = vector.multi_reduction <add>, %33, %cst_16 [0] : vector<2x8x128xf32> to vector<8x128xf32>
    %35 = arith.addf %31, %34 : vector<8x128xf32>
    %c0_17 = arith.constant 0 : index
    %c0_18 = arith.constant 0 : index
    %36 = vector.load %arg5[%c0_17, %c0_18] : memref<8x128xf32, #tpu.memory_space<vmem>>, vector<8x128xf32>
    tpu.vector_store %arg5[%c0_17, %c0_18], %35 {strides = array<i32>} : memref<8x128xf32, #tpu.memory_space<vmem>>, vector<8x128xf32>,
    %c0_19 = arith.constant 0 : index
    %c0_20 = arith.constant 0 : index
    %37 = vector.load %arg6[%c0_19, %c0_20] : memref<8x128xf32, #tpu.memory_space<vmem>>, vector<8x128xf32>
    %38 = vector.shape_cast %24 : vector<16x128xf32> to vector<2x8x128xf32>
    %cst_21 = arith.constant dense<0.000000e+00> : vector<8x128xf32>
    %39 = vector.multi_reduction <add>, %38, %cst_21 [0] : vector<2x8x128xf32> to vector<8x128xf32>
    %40 = arith.addf %37, %39 : vector<8x128xf32>
    %c0_22 = arith.constant 0 : index
    %c0_23 = arith.constant 0 : index
    %41 = vector.load %arg6[%c0_22, %c0_23] : memref<8x128xf32, #tpu.memory_space<vmem>>, vector<8x128xf32>
    tpu.vector_store %arg6[%c0_22, %c0_23], %40 {strides = array<i32>} : memref<8x128xf32, #tpu.memory_space<vmem>>, vector<8x128xf32>,
    %c0_i32_24 = arith.constant 0 : i32
    %42 = arith.cmpi eq, %arg0, %c0_i32_24 : i32
    %43 = arith.extui %42 : i1 to i32
    %c0_i32_25 = arith.constant 0 : i32
    %44 = arith.cmpi ne, %43, %c0_i32_25 : i32
    scf.if %44 {
      %c0_26 = arith.constant 0 : index
      %c0_27 = arith.constant 0 : index
      %45 = vector.load %arg4[%c0_26, %c0_27] : memref<8x128xf32, #tpu.memory_space<vmem>>, vector<8x128xf32>
      %46 = vector.shape_cast %45 : vector<8x128xf32> to vector<1x8x128xf32>
      %cst_28 = arith.constant dense<0.000000e+00> : vector<1xf32>
      %47 = vector.multi_reduction <add>, %46, %cst_28 [1, 2] : vector<1x8x128xf32> to vector<1xf32>
      %48 = vector.shape_cast %47 : vector<1xf32> to vector<1x1x1xf32>
      %49 = vector.extract %48[0, 0, 0] : f32 from vector<1x1x1xf32>
      %50 = vector.broadcast %49 : f32 to vector<1x1xf32>
      %c0_29 = arith.constant 0 : index
      %c0_30 = arith.constant 0 : index
      %51 = vector.load %arg5[%c0_29, %c0_30] : memref<8x128xf32, #tpu.memory_space<vmem>>, vector<8x128xf32>
      %52 = vector.shape_cast %51 : vector<8x128xf32> to vector<1x8x128xf32>
      %cst_31 = arith.constant dense<0.000000e+00> : vector<1xf32>
      %53 = vector.multi_reduction <add>, %52, %cst_31 [1, 2] : vector<1x8x128xf32> to vector<1xf32>
      %54 = vector.shape_cast %53 : vector<1xf32> to vector<1x1x1xf32>
      %55 = vector.extract %54[0, 0, 0] : f32 from vector<1x1x1xf32>
      %56 = vector.broadcast %55 : f32 to vector<1x1xf32>
      %c0_32 = arith.constant 0 : index
      %c0_33 = arith.constant 0 : index
      %57 = vector.load %arg6[%c0_32, %c0_33] : memref<8x128xf32, #tpu.memory_space<vmem>>, vector<8x128xf32>
      %58 = vector.shape_cast %57 : vector<8x128xf32> to vector<1x8x128xf32>
      %cst_34 = arith.constant dense<0.000000e+00> : vector<1xf32>
      %59 = vector.multi_reduction <add>, %58, %cst_34 [1, 2] : vector<1x8x128xf32> to vector<1xf32>
      %60 = vector.shape_cast %59 : vector<1xf32> to vector<1x1x1xf32>
      %61 = vector.extract %60[0, 0, 0] : f32 from vector<1x1x1xf32>
      %62 = vector.broadcast %61 : f32 to vector<1x1xf32>
      %cst_35 = arith.constant 2.000000e+00 : f32
      %63 = vector.broadcast %cst_35 : f32 to vector<1x1xf32>
      %64 = arith.mulf %63, %50 : vector<1x1xf32>
      %cst_36 = arith.constant 1.000000e+00 : f32
      %65 = vector.broadcast %cst_36 : f32 to vector<1x1xf32>
      %66 = arith.addf %64, %65 : vector<1x1xf32>
      %cst_37 = arith.constant 1.000000e+00 : f32
      %67 = vector.broadcast %cst_37 : f32 to vector<1x1xf32>
      %68 = arith.addf %56, %67 : vector<1x1xf32>
      %69 = arith.divf %66, %68 : vector<1x1xf32>
      %cst_38 = arith.constant 1.000000e+00 : f32
      %70 = vector.broadcast %cst_38 : f32 to vector<1x1xf32>
      %71 = arith.subf %70, %69 : vector<1x1xf32>
      %cst_39 = arith.constant 4.8828125E-4 : f32
      %72 = vector.broadcast %cst_39 : f32 to vector<1x1xf32>
      %73 = arith.mulf %62, %72 : vector<1x1xf32>
      %74 = arith.addf %73, %71 : vector<1x1xf32>
      %c0_40 = arith.constant 0 : index
      %c0_41 = arith.constant 0 : index
      %75 = vector.load %arg3[%c0_40, %c0_41] : memref<1x1xf32, #tpu.memory_space<vmem>>, vector<1x1xf32>
      tpu.vector_store %arg3[%c0_40, %c0_41], %74 {strides = array<i32>} : memref<1x1xf32, #tpu.memory_space<vmem>>, vector<1x1xf32>,
    } else {
    }
    return
  }
  func.func @transform_0(%arg0: i32) -> (i32, i32) {
    %c0_i32 = arith.constant 0 : i32
    %c0_i32_0 = arith.constant 0 : i32
    return %arg0, %c0_i32 : i32, i32
  }
  func.func @transform_1(%arg0: i32) -> (i32, i32) {
    %c0_i32 = arith.constant 0 : i32
    %c0_i32_0 = arith.constant 0 : i32
    return %arg0, %c0_i32 : i32, i32
  }
  func.func @transform_2(%arg0: i32) -> (i32, i32) {
    %c0_i32 = arith.constant 0 : i32
    %c0_i32_0 = arith.constant 0 : i32
    %c0_i32_1 = arith.constant 0 : i32
    return %c0_i32, %c0_i32_0 : i32, i32
  }
}

</mosaic_0001>

<llo_original>
// kernel: tpu_custom_call.1
$region0: #{tpu_custom_call.1}
  #allocation0 [shape = 'u32[]', space=smem, size = 0x4, offset = 0x4, fixed_abs, tag = 'smem constant byte address 0x4 - core index']
  #allocation1 [shape = 'u32[144,128]{1,0:T(1,128)}', space=vmem, size = 0x12000, scoped, tag = 'internal scratch']
  #allocation2 [shape = 'f32[8,128]{1,0:T(8,128)}', space=vmem, size = 0x1000, scoped, tag = 'scratch operand']
  #allocation3 [shape = 'f32[8,128]{1,0:T(8,128)}', space=vmem, size = 0x1000, scoped, tag = 'scratch operand']
  #allocation4 [shape = 'f32[8,128]{1,0:T(8,128)}', space=vmem, size = 0x1000, scoped, tag = 'scratch operand']
  %s0 = inlined_call_operand.hbm [shape: f32[16,128], index: 0, kind: input, shape index: {}]
  %s1 = inlined_call_operand.hbm [shape: f32[16,128], index: 1, kind: input, shape index: {}]
  %s2 = inlined_call_operand.hbm [shape: f32[1,1], index: 2, kind: output, shape index: {}]
  %s3 = sld [smem:[#allocation0]]
  $region34: #{tpu_custom_call.1} parent=0
    _
  %s5 = ssub.s32 1, %s3
  %s6 = scalar_select 0, %s5, %s3
  $region1: #{tpu_custom_call.1} parent=0
    #allocation5 [shape = 'u8[8192]{0}', space=vmem, size = 0x2000, scoped, tag = 'input window, operand 0, single buffered']
    #allocation6 [shape = 's32[1]{0}', space=sflag, size = 0x4, scoped, tag = 'scoped memory for tpu_custom_call.1']
    #allocation7 [shape = 's32[1]{0}', space=sflag, size = 0x4, scoped, tag = 'scoped memory for tpu_custom_call.1']
    #allocation8 [shape = 'u8[8192]{0}', space=vmem, size = 0x2000, scoped, tag = 'input window, operand 1, single buffered']
    #allocation9 [shape = 's32[1]{0}', space=sflag, size = 0x4, scoped, tag = 'scoped memory for tpu_custom_call.1']
    #allocation10 [shape = 'u8[512]{0}', space=vmem, size = 0x400, scoped, tag = 'output window, operand 0, single buffered']
    %7 = vsyncpa [#allocation6], 0
    %8 = vsyncpa [#allocation9], 0
    %9 = vsyncpa [#allocation7], 0
    // Predicated region
    $region2: #{tpu_custom_call.1} parent=1 // pred_check
      _
    $region3: #{tpu_custom_call.1} parent=1 // pred_check_branch
      %11 = sbr.rel (0) target = $region5
    $region4: #{tpu_custom_call.1} parent=1 // pred_region
      %s13 = ssub.s32 256, 256
      %14 = vsyncadd [#allocation6], %s13
      %s15 = sshll.u32 [#allocation5], 4
      %s16 = int_to_ptr.vmem [resolvable:$true] %s15
      %21 = dma.hbm_to_vmem [thread:$0]  %s0, 256, %s16, [#allocation6], 128, 128, 8
    $region5: #{tpu_custom_call.1} parent=1 // pred_fallthru
      _
    // Predicated region
    $region6: #{tpu_custom_call.1} parent=1 // pred_check
      _
    $region7: #{tpu_custom_call.1} parent=1 // pred_check_branch
      %23 = sbr.rel (0) target = $region9
    $region8: #{tpu_custom_call.1} parent=1 // pred_region
      %s25 = ssub.s32 256, 256
      %26 = vsyncadd [#allocation9], %s25
      %s27 = sshll.u32 [#allocation8], 4
      %s28 = int_to_ptr.vmem [resolvable:$true] %s27
      %33 = dma.hbm_to_vmem [thread:$0]  %s1, 256, %s28, [#allocation9], 128, 128, 8
    $region9: #{tpu_custom_call.1} parent=1 // pred_fallthru
      _
    // Predicated region
    $region10: #{tpu_custom_call.1} parent=1 // pred_check
      _
    $region11: #{tpu_custom_call.1} parent=1 // pred_check_branch
      %35 = sbr.rel (0) target = $region13
    $region12: #{tpu_custom_call.1} parent=1 // pred_region
      %36 = dma.done [#allocation6], 256
    $region13: #{tpu_custom_call.1} parent=1 // pred_fallthru
      _
    // Predicated region
    $region14: #{tpu_custom_call.1} parent=1 // pred_check
      _
    $region15: #{tpu_custom_call.1} parent=1 // pred_check_branch
      %38 = sbr.rel (0) target = $region17
    $region16: #{tpu_custom_call.1} parent=1 // pred_region
      %39 = dma.done [#allocation9], 256
    $region17: #{tpu_custom_call.1} parent=1 // pred_fallthru
      _
    %p40 = scmp.eq.s32.totalorder 0, 0
    // Predicated region
    $region18: #{tpu_custom_call.1} parent=1 // pred_check
      %p41 = pneg %p40
    $region19: #{tpu_custom_call.1} parent=1 // pred_check_branch
      %43 = sbr.rel (%p41) target = $region21
    $region20: #{tpu_custom_call.1} parent=1 // pred_region
      %44 = vst [vmem:[#allocation2] sm:$0xff] 0.0
      %45 = vst [vmem:[#allocation3] sm:$0xff] 0.0
      %46 = vst [vmem:[#allocation4] sm:$0xff] 0.0
    $region21: #{tpu_custom_call.1} parent=1 // pred_fallthru
      _
    %v47 = vld [vmem:[#allocation5] sm:$0xff]
    %v48 = vld [vmem:[#allocation5 + $0x8] sm:$0xff]
    %v49 = vld [vmem:[#allocation8] sm:$0xff]
    %v50 = vld [vmem:[#allocation8 + $0x8] sm:$0xff]
    %v51 = vand.u32 2147483647, %v47
    %v52 = vand.u32 2147483647, %v48
    %v53 = vsub.f32 0.0, %v51
    %v54 = vsub.f32 0.0, %v52
    %v55 = vmul.f32 %v53, 1.442695
    %v56 = vpow.pop %v55
    %v57 = vmul.f32 %v54, 1.442695
    %v58 = vpow.pop %v57
    %v59 = vadd.f32 %v56, 1.0
    %v60 = vlog2.pop %v59
    %v61 = vmul.f32 %v60, 0.6931472
    %v62 = vmul.f32 -0.5, %v56
    %v63 = vadd.f32 %v62, 1.0
    %v64 = vmul.f32 %v63, %v56
    %v65 = vand.u32 2147483647, %v56
    %vm66 = vcmp.lt.f32.partialorder %v65, 0.0004427343
    %v67 = vsel %vm66, %v64, %v61
    %v68 = vadd.f32 %v58, 1.0
    %v69 = vlog2.pop %v68
    %v70 = vmul.f32 %v69, 0.6931472
    %v71 = vmul.f32 -0.5, %v58
    %v72 = vadd.f32 %v71, 1.0
    %v73 = vmul.f32 %v72, %v58
    %v74 = vand.u32 2147483647, %v58
    %vm75 = vcmp.lt.f32.partialorder %v74, 0.0004427343
    %v76 = vsel %vm75, %v73, %v70
    %vm77 = vcmp.ge.f32.partialorder %v47, 0.0
    %vm78 = vcmp.ge.f32.partialorder %v48, 0.0
    %v79 = vsel %vm77, 1.0, %v56
    %v80 = vsel %vm78, 1.0, %v58
    %v81 = vadd.f32 %v56, 1.0
    %v82 = vadd.f32 %v58, 1.0
    %v83 = vrcp.pop %v81
    %v84 = vrcp.pop %v82
    %v85 = vmul.f32 %v79, %v83
    %v86 = vmul.f32 %v80, %v84
    %v87 = vmax.f32 %v47, 0.0
    %v88 = vmax.f32 %v48, 0.0
    %v89 = vmul.f32 %v47, %v49
    %v90 = vmul.f32 %v48, %v50
    %v91 = vsub.f32 %v87, %v89
    %v92 = vsub.f32 %v88, %v90
    %v93 = vadd.f32 %v91, %v67
    %v94 = vadd.f32 %v92, %v76
    %v95 = vmin.f32 %v93, 100.0
    %v96 = vmin.f32 %v94, 100.0
    %v97 = vld [vmem:[#allocation2] sm:$0xff]
    %v98 = vmul.f32 %v85, %v49
    %v99 = vmul.f32 %v86, %v50
    %v100 = vadd.f32 %v98, %v99
    %v101 = vadd.f32 %v97, %v100
    %102 = vst [vmem:[#allocation2] sm:$0xff] %v101
    %v103 = vld [vmem:[#allocation3] sm:$0xff]
    %v104 = vadd.f32 %v85, %v49
    %v105 = vadd.f32 %v86, %v50
    %v106 = vadd.f32 %v104, %v105
    %v107 = vadd.f32 %v103, %v106
    %108 = vst [vmem:[#allocation3] sm:$0xff] %v107
    %v109 = vld [vmem:[#allocation4] sm:$0xff]
    %v110 = vadd.f32 %v95, %v96
    %v111 = vadd.f32 %v109, %v110
    %112 = vst [vmem:[#allocation4] sm:$0xff] %v111
    // Predicated region
    $region22: #{tpu_custom_call.1} parent=1 // pred_check
      %p113 = pneg %p40
    $region23: #{tpu_custom_call.1} parent=1 // pred_check_branch
      %115 = sbr.rel (%p113) target = $region25
    $region24: #{tpu_custom_call.1} parent=1 // pred_region
      %v116 = vld [vmem:[#allocation2] sm:$0xff]
      %117 = vadd.xlane.f32.xlu0 %v116
      %v118 = vpop.xlane.xlu0 %117
      %v119 = vrot.slane %v118, 4
      %v120 = vadd.f32 %v118, %v119
      %v121 = vrot.slane %v120, 2
      %v122 = vadd.f32 %v120, %v121
      %v123 = vrot.slane %v122, 1
      %v124 = vadd.f32 %v122, %v123
      %s125 = vtos %v124
      %v126 = vstv %s125
      %v127 = vld [vmem:[#allocation3] sm:$0xff]
      %128 = vadd.xlane.f32.xlu0 %v127
      %v129 = vpop.xlane.xlu0 %128
      %v130 = vrot.slane %v129, 4
      %v131 = vadd.f32 %v129, %v130
      %v132 = vrot.slane %v131, 2
      %v133 = vadd.f32 %v131, %v132
      %v134 = vrot.slane %v133, 1
      %v135 = vadd.f32 %v133, %v134
      %s136 = vtos %v135
      %v137 = vstv %s136
      %v138 = vld [vmem:[#allocation4] sm:$0xff]
      %139 = vadd.xlane.f32.xlu0 %v138
      %v140 = vpop.xlane.xlu0 %139
      %v141 = vrot.slane %v140, 4
      %v142 = vadd.f32 %v140, %v141
      %v143 = vrot.slane %v142, 2
      %v144 = vadd.f32 %v142, %v143
      %v145 = vrot.slane %v144, 1
      %v146 = vadd.f32 %v144, %v145
      %s147 = vtos %v146
      %v148 = vstv %s147
      %v149 = vmul.f32 %v126, 2.0
      %v150 = vadd.f32 %v149, 1.0
      %v151 = vadd.f32 %v137, 1.0
      %v152 = vrcp.pop %v151
      %v153 = vmul.f32 %v150, %v152
      %v154 = vsub.f32 1.0, %v153
      %v155 = vmul.f32 %v148, 0.00048828125
      %v156 = vadd.f32 %v155, %v154
      %vm157 = vcmask 0
      %158 = vst.msk [vmem:[#allocation10] sm:$0x1] %vm157, %v156
    $region25: #{tpu_custom_call.1} parent=1 // pred_fallthru
      _
    // Predicated region
    $region26: #{tpu_custom_call.1} parent=1 // pred_check
      _
    $region27: #{tpu_custom_call.1} parent=1 // pred_check_branch
      %160 = sbr.rel (0) target = $region29
    $region28: #{tpu_custom_call.1} parent=1 // pred_region
      %s162 = ssub.s32 16, 16
      %163 = vsyncadd [#allocation7], %s162
      %s165 = sshll.u32 [#allocation10], 4
      %s166 = int_to_ptr.vmem [resolvable:$true] %s165
      %168 = dma.vmem_to_hbm [thread:$0]  %s166, 16, %s2, [#allocation7]
    $region29: #{tpu_custom_call.1} parent=1 // pred_fallthru
      _
    // Predicated region
    $region30: #{tpu_custom_call.1} parent=1 // pred_check
      _
    $region31: #{tpu_custom_call.1} parent=1 // pred_check_branch
      %170 = sbr.rel (0) target = $region33
    $region32: #{tpu_custom_call.1} parent=1 // pred_region
      %171 = dma.done [#allocation7], 16
    $region33: #{tpu_custom_call.1} parent=1 // pred_fallthru
      _
    %172 = vsyncpa [#allocation6], 1
    %173 = vsyncpa [#allocation9], 1
    %174 = vsyncpa [#allocation7], 1

</llo_original>
